<compile_context>
chip_gen: v6e
topology: v6e:2x2x1
jax: 0.10.0
libtpu: 0.0.40
codegen_flags: <defaults>
</compile_context>

<pallas_src>
import math
from functools import partial

import jax
import jax.numpy as jnp
from jax import lax
from jax.experimental import pallas as pl
from jax.experimental.pallas import tpu as pltpu


def _vmem_limit_bytes():
    """~80% of physical VMEM (~100 MiB on v5e/v6e, ~51 MiB on v7x)."""
    cap = 0
    try:
        cap = int(pltpu.get_tpu_info().vmem_capacity_bytes)
    except Exception:
        cap = 0
    if cap <= 0:
        cap = 64 * 1024 * 1024  # conservative (v7x-sized) fallback
    return int(cap * 0.8)


def _split_heads(x, n_heads, head_dim):
    """(S, H*D) -> (H, S, D): one in-VMEM layout change per operand."""
    seq = x.shape[0]
    return jnp.swapaxes(x.reshape(seq, n_heads, head_dim), 0, 1)


def _merge_heads(x):
    """(H, S, D) -> (S, H*D): one in-VMEM layout change for the output."""
    n_heads, seq, head_dim = x.shape
    return jnp.swapaxes(x, 0, 1).reshape(seq, n_heads * head_dim)


def _attn_kernel_packed(q_ref, k_ref, v_ref, o_ref, *, n_heads, head_dim,
                        scale, matmul_dtype):
    """Blocks are (1, S, E): one batch element, all heads (head_dim < 128)."""

    def load_split(ref, apply_scale):
        x = ref[0]                                     # (S, E)
        if apply_scale:
            x = x * scale                              # fold 1/sqrt(D) into q
        if matmul_dtype is not None and x.dtype != matmul_dtype:
            x = x.astype(matmul_dtype)                 # bf16 MXU operands
        return _split_heads(x, n_heads, head_dim)      # (H, S, D)

    q = load_split(q_ref, True)
    k = load_split(k_ref, False)
    v = load_split(v_ref, False)

    # scores[h] = q[h] @ k[h]^T without explicit transpose: contract last dims,
    # batch over heads.  f32 accumulation on the MXU.
    s = lax.dot_general(q, k, (((2,), (2,)), ((0,), (0,))),
                        preferred_element_type=jnp.float32)          # (H, S, S)

    # Numerically stable softmax statistics in f32.
    m = jnp.max(s, axis=-1, keepdims=True)
    p = jnp.exp(s - m)
    denom = jnp.sum(p, axis=-1, keepdims=True)                       # (H, S, 1)

    # Un-normalized PV matmul (batched over heads), f32 accumulate; normalize
    # afterwards with an exact reciprocal.
    o = lax.dot_general(p.astype(v.dtype), v, (((2,), (1,)), ((0,), (0,))),
                        preferred_element_type=jnp.float32)          # (H, S, D)
    o = o * pl.reciprocal(denom, approx=False)

    # Single lane-dense (S, E) store.
    o_ref[0] = _merge_heads(o).astype(o_ref.dtype)


def _attn_kernel_per_head(q_ref, k_ref, v_ref, o_ref, *, scale, matmul_dtype):
    """Blocks are (1, S, head_dim): one head per step (head_dim % 128 == 0)."""
    q = q_ref[0] * scale                               # (S, D)
    k = k_ref[0]
    v = v_ref[0]
    if matmul_dtype is not None and q.dtype != matmul_dtype:
        q = q.astype(matmul_dtype)
        k = k.astype(matmul_dtype)
        v = v.astype(matmul_dtype)

    s = lax.dot_general(q, k, (((1,), (1,)), ((), ())),
                        preferred_element_type=jnp.float32)          # (S, S)
    m = jnp.max(s, axis=-1, keepdims=True)
    p = jnp.exp(s - m)
    denom = jnp.sum(p, axis=-1, keepdims=True)
    o = jnp.dot(p.astype(v.dtype), v, preferred_element_type=jnp.float32)
    o_ref[0] = (o * pl.reciprocal(denom, approx=False)).astype(o_ref.dtype)


def temporal_attention(q, k, v, n_heads, mask=None, *, prefer_bf16_matmul=True):
    """Pallas TPU implementation of TemporalAttention.forward (mask=None path).

    q, k, v: (batch, seq, d_model).  Returns (batch, seq, d_model).
    """
    assert mask is None  # TODO(synk): optional mask (masked_fill -inf) not wired in
    batch, seq, d_model = q.shape
    assert k.shape == q.shape and v.shape == q.shape
    assert d_model % n_heads == 0
    head_dim = d_model // n_heads
    scale = 1.0 / math.sqrt(head_dim)

    matmul_dtype = None
    if prefer_bf16_matmul and q.dtype == jnp.float32:
        matmul_dtype = jnp.bfloat16  # bf16 MXU operands, f32 accumulation

    vmem_limit = _vmem_limit_bytes()

    if head_dim % 128 == 0:
        # Lane-aligned heads: grid over (batch, heads).  No in-kernel layout
        # work, smaller per-step I/O (S*head_dim per operand), only one head's
        # (S, S) scores resident, and more parallel steps for v7x's 2 TCs.
        block = pl.BlockSpec((1, seq, head_dim), lambda b, h: (b, 0, h))
        return pl.pallas_call(
            partial(_attn_kernel_per_head, scale=scale, matmul_dtype=matmul_dtype),
            out_shape=jax.ShapeDtypeStruct((batch, seq, d_model), q.dtype),
            grid_spec=pltpu.PrefetchScalarGridSpec(
                num_scalar_prefetch=0,
                grid=(batch, n_heads),
                in_specs=[block, block, block],
                out_specs=block,
            ),
            compiler_params=pltpu.CompilerParams(
                dimension_semantics=("parallel", "parallel"),
                vmem_limit_bytes=vmem_limit),
        )(q, k, v)

    # head_dim not lane-aligned: keep lane-dense (1, S, E) slabs (no HBM
    # transposes) and split heads in-VMEM with one layout change per operand.
    block = pl.BlockSpec((1, seq, d_model), lambda b: (b, 0, 0))
    return pl.pallas_call(
        partial(_attn_kernel_packed, n_heads=n_heads, head_dim=head_dim,
                scale=scale, matmul_dtype=matmul_dtype),
        out_shape=jax.ShapeDtypeStruct((batch, seq, d_model), q.dtype),
        grid_spec=pltpu.PrefetchScalarGridSpec(
            num_scalar_prefetch=0,
            grid=(batch,),
            in_specs=[block, block, block],
            out_specs=block,
        ),
        compiler_params=pltpu.CompilerParams(
            dimension_semantics=("parallel",),
            vmem_limit_bytes=vmem_limit),
    )(q, k, v)


def _reference(q, k, v, n_heads):
    batch, seq, d_model = q.shape
    head_dim = d_model // n_heads
    qh = q.reshape(batch, seq, n_heads, head_dim).transpose(0, 2, 1, 3)
    kh = k.reshape(batch, seq, n_heads, head_dim).transpose(0, 2, 1, 3)
    vh = v.reshape(batch, seq, n_heads, head_dim).transpose(0, 2, 1, 3)
    scores = jnp.einsum("bhqd,bhkd->bhqk", qh, kh,
                        precision=lax.Precision.HIGHEST) / math.sqrt(head_dim)
    attn = jax.nn.softmax(scores, axis=-1)
    out = jnp.einsum("bhqk,bhkd->bhqd", attn, vh, precision=lax.Precision.HIGHEST)
    return out.transpose(0, 2, 1, 3).reshape(batch, seq, d_model)


if __name__ == "__main__":
    # Small config consistent with the module: d_model=32, n_heads=4, seq=8, batch=2
    batch, seq, d_model, n_heads = 2, 8, 32, 4

    key = jax.random.PRNGKey(0)
    kq, kk, kv = jax.random.split(key, 3)
    q = jax.random.normal(kq, (batch, seq, d_model), dtype=jnp.float32)
    k = jax.random.normal(kk, (batch, seq, d_model), dtype=jnp.float32)
    v = jax.random.normal(kv, (batch, seq, d_model), dtype=jnp.float32)

    ref = _reference(q, k, v, n_heads)

    # Default path: bf16 MXU operands with f32 accumulation (perf default);
    # tolerance reflects the deliberate bf16 operand rounding.
    out = jax.block_until_ready(temporal_attention(q, k, v, n_heads))
    assert out.shape == (batch, seq, d_model)
    assert jnp.allclose(out, ref, atol=5e-2, rtol=5e-2), "mismatch (bf16-matmul path)"

    # Full-precision operand path: exact reciprocal, tighter tolerance.
    out_f32 = jax.block_until_ready(
        temporal_attention(q, k, v, n_heads, prefer_bf16_matmul=False))
    assert jnp.allclose(out_f32, ref, atol=2e-3, rtol=2e-3), "mismatch (f32-matmul path)"

    print("KERNEL_OK")
</pallas_src>

<mosaic_0001>
module attributes {stable_mosaic.version = 11 : i64} {
  func.func @_attn_kernel_packed(%arg0: i32, %arg1: memref<1x8x32xf32, #tpu.memory_space<vmem>>, %arg2: memref<1x8x32xf32, #tpu.memory_space<vmem>>, %arg3: memref<1x8x32xf32, #tpu.memory_space<vmem>>, %arg4: memref<1x8x32xf32, #tpu.memory_space<vmem>>) attributes {dimension_semantics = [#tpu.dimension_semantics<parallel>], iteration_bounds = array<i64: 2>, scalar_prefetch = 0 : i64, scratch_operands = 0 : i64, tpu.core_type = #tpu.core_type<tc>, window_params = [{transform_indices = @transform_0, window_bounds = array<i64: 1, 8, 32>}, {transform_indices = @transform_1, window_bounds = array<i64: 1, 8, 32>}, {transform_indices = @transform_2, window_bounds = array<i64: 1, 8, 32>}, {transform_indices = @transform_3, window_bounds = array<i64: 1, 8, 32>}]} {
    %c0 = arith.constant 0 : index
    %c0_0 = arith.constant 0 : index
    %c0_1 = arith.constant 0 : index
    %0 = vector.load %arg1[%c0, %c0_0, %c0_1] : memref<1x8x32xf32, #tpu.memory_space<vmem>>, vector<1x8x32xf32>
    %1 = vector.shape_cast %0 : vector<1x8x32xf32> to vector<8x32xf32>
    %cst = arith.constant 0.353553385 : f32
    %2 = vector.broadcast %cst : f32 to vector<8x32xf32>
    %3 = arith.mulf %1, %2 : vector<8x32xf32>
    %4 = arith.truncf %3 : vector<8x32xf32> to vector<8x32xbf16>
    %5 = vector.shape_cast %4 : vector<8x32xbf16> to vector<8x4x8xbf16>
    %6 = tpu.transpose %5, [1, 0, 2] : vector<8x4x8xbf16> -> vector<4x8x8xbf16>
    %c0_2 = arith.constant 0 : index
    %c0_3 = arith.constant 0 : index
    %c0_4 = arith.constant 0 : index
    %7 = vector.load %arg2[%c0_2, %c0_3, %c0_4] : memref<1x8x32xf32, #tpu.memory_space<vmem>>, vector<1x8x32xf32>
    %8 = vector.shape_cast %7 : vector<1x8x32xf32> to vector<8x32xf32>
    %9 = arith.truncf %8 : vector<8x32xf32> to vector<8x32xbf16>
    %10 = vector.shape_cast %9 : vector<8x32xbf16> to vector<8x4x8xbf16>
    %11 = tpu.transpose %10, [1, 0, 2] : vector<8x4x8xbf16> -> vector<4x8x8xbf16>
    %c0_5 = arith.constant 0 : index
    %c0_6 = arith.constant 0 : index
    %c0_7 = arith.constant 0 : index
    %12 = vector.load %arg3[%c0_5, %c0_6, %c0_7] : memref<1x8x32xf32, #tpu.memory_space<vmem>>, vector<1x8x32xf32>
    %13 = vector.shape_cast %12 : vector<1x8x32xf32> to vector<8x32xf32>
    %14 = arith.truncf %13 : vector<8x32xf32> to vector<8x32xbf16>
    %15 = vector.shape_cast %14 : vector<8x32xbf16> to vector<8x4x8xbf16>
    %16 = tpu.transpose %15, [1, 0, 2] : vector<8x4x8xbf16> -> vector<4x8x8xbf16>
    %cst_8 = arith.constant dense<0.000000e+00> : vector<4x8x8xf32>
    %17 = tpu.matmul %6, %11, %cst_8 {dimension_numbers = #tpu.dot_dimension_numbers<[2], [2], [1], [1], [0, 0, 0, 1, 1, 1], [0], [0]>} : vector<4x8x8xbf16>, vector<4x8x8xbf16>, vector<4x8x8xf32> -> vector<4x8x8xf32>
    %cst_9 = arith.constant dense<0xFF800000> : vector<4x8xf32>
    %18 = vector.multi_reduction <maximumf>, %17, %cst_9 [2] : vector<4x8x8xf32> to vector<4x8xf32>
    %19 = vector.shape_cast %18 : vector<4x8xf32> to vector<4x8x1xf32>
    %20 = vector.broadcast %19 : vector<4x8x1xf32> to vector<4x8x8xf32>
    %21 = arith.subf %17, %20 : vector<4x8x8xf32>
    %22 = math.exp %21 : vector<4x8x8xf32>
    %cst_10 = arith.constant dense<0.000000e+00> : vector<4x8xf32>
    %23 = vector.multi_reduction <add>, %22, %cst_10 [2] : vector<4x8x8xf32> to vector<4x8xf32>
    %24 = vector.shape_cast %23 : vector<4x8xf32> to vector<4x8x1xf32>
    %25 = arith.truncf %22 : vector<4x8x8xf32> to vector<4x8x8xbf16>
    %cst_11 = arith.constant dense<0.000000e+00> : vector<4x8x8xf32>
    %26 = tpu.matmul %25, %16, %cst_11 {dimension_numbers = #tpu.dot_dimension_numbers<[2], [1], [1], [2], [0, 0, 0, 1, 1, 2], [0], [0]>} : vector<4x8x8xbf16>, vector<4x8x8xbf16>, vector<4x8x8xf32> -> vector<4x8x8xf32>
    %27 = tpu.reciprocal %24 : vector<4x8x1xf32> -> vector<4x8x1xf32>
    %28 = vector.broadcast %27 : vector<4x8x1xf32> to vector<4x8x8xf32>
    %29 = arith.mulf %26, %28 : vector<4x8x8xf32>
    %30 = tpu.transpose %29, [1, 0, 2] : vector<4x8x8xf32> -> vector<8x4x8xf32>
    %31 = vector.shape_cast %30 : vector<8x4x8xf32> to vector<8x32xf32>
    %c0_12 = arith.constant 0 : index
    %c0_13 = arith.constant 0 : index
    %c0_14 = arith.constant 0 : index
    %32 = vector.load %arg4[%c0_12, %c0_13, %c0_14] : memref<1x8x32xf32, #tpu.memory_space<vmem>>, vector<1x8x32xf32>
    %33 = vector.shape_cast %32 : vector<1x8x32xf32> to vector<8x32xf32>
    %34 = vector.shape_cast %31 : vector<8x32xf32> to vector<1x8x32xf32>
    tpu.vector_store %arg4[%c0_12, %c0_13, %c0_14], %34 {strides = array<i32>} : memref<1x8x32xf32, #tpu.memory_space<vmem>>, vector<1x8x32xf32>,
    return
  }
  func.func @transform_0(%arg0: i32) -> (i32, i32, i32) {
    %c0_i32 = arith.constant 0 : i32
    %c0_i32_0 = arith.constant 0 : i32
    %c0_i32_1 = arith.constant 0 : i32
    return %arg0, %c0_i32, %c0_i32_0 : i32, i32, i32
  }
  func.func @transform_1(%arg0: i32) -> (i32, i32, i32) {
    %c0_i32 = arith.constant 0 : i32
    %c0_i32_0 = arith.constant 0 : i32
    %c0_i32_1 = arith.constant 0 : i32
    return %arg0, %c0_i32, %c0_i32_0 : i32, i32, i32
  }
  func.func @transform_2(%arg0: i32) -> (i32, i32, i32) {
    %c0_i32 = arith.constant 0 : i32
    %c0_i32_0 = arith.constant 0 : i32
    %c0_i32_1 = arith.constant 0 : i32
    return %arg0, %c0_i32, %c0_i32_0 : i32, i32, i32
  }
  func.func @transform_3(%arg0: i32) -> (i32, i32, i32) {
    %c0_i32 = arith.constant 0 : i32
    %c0_i32_0 = arith.constant 0 : i32
    %c0_i32_1 = arith.constant 0 : i32
    return %arg0, %c0_i32, %c0_i32_0 : i32, i32, i32
  }
}

</mosaic_0001>

<llo_original>
// kernel: tpu_custom_call.1
$region0: #{tpu_custom_call.1}
  #allocation0 [shape = 'u32[]', space=smem, size = 0x4, offset = 0x4, fixed_abs, tag = 'smem constant byte address 0x4 - core index']
  #allocation1 [shape = 'u32[144,128]{1,0:T(1,128)}', space=vmem, size = 0x12000, scoped, tag = 'internal scratch']
  %s0 = inlined_call_operand.hbm [shape: f32[2,8,32], index: 0, kind: input, shape index: {}]
  %s1 = inlined_call_operand.hbm [shape: f32[2,8,32], index: 1, kind: input, shape index: {}]
  %s2 = inlined_call_operand.hbm [shape: f32[2,8,32], index: 2, kind: input, shape index: {}]
  %s3 = inlined_call_operand.hbm [shape: f32[2,8,32], index: 3, kind: output, shape index: {}]
  %s4 = sld [smem:[#allocation0]]
  $region57: #{tpu_custom_call.1} parent=0
    _
  %s6 = ssub.s32 1, %s4
  %s7 = scalar_select 0, %s6, %s4
  $region1: #{tpu_custom_call.1} parent=0
    #allocation2 [shape = 'u8[8192]{0}', space=vmem, size = 0x2000, scoped, tag = 'input window, operand 0']
    #allocation3 [shape = 's32[2]{0}', space=sflag, size = 0x8, scoped, tag = 'scoped memory for tpu_custom_call.1']
    #allocation4 [shape = 's32[2]{0}', space=sflag, size = 0x8, scoped, tag = 'scoped memory for tpu_custom_call.1']
    #allocation5 [shape = 'u8[8192]{0}', space=vmem, size = 0x2000, scoped, tag = 'input window, operand 1']
    #allocation6 [shape = 's32[2]{0}', space=sflag, size = 0x8, scoped, tag = 'scoped memory for tpu_custom_call.1']
    #allocation7 [shape = 'u8[8192]{0}', space=vmem, size = 0x2000, scoped, tag = 'input window, operand 2']
    #allocation8 [shape = 'u8[8192]{0}', space=vmem, size = 0x2000, scoped, tag = 'output window, operand 0']
    %8 = vsyncpa [#allocation3], 0
    %s9 = scalar_lea.sflag [#allocation3], 1
    %10 = vsyncpa %s9, 0
    %11 = vsyncpa [#allocation6], 0
    %s12 = scalar_lea.sflag [#allocation6], 1
    %13 = vsyncpa %s12, 0
    %14 = vsyncpa [#allocation4], 0
    %s15 = scalar_lea.sflag [#allocation4], 1
    %16 = vsyncpa %s15, 0
    loop: start=0, step=1, limit=4
    $region2: #{tpu_custom_call.1} parent=1 // loop_pre_header
      _
    $region3: #{tpu_custom_call.1} parent=1 // loop_header
      %s18 = sphi 0, %s22
      %p19 = scmp.ge.s32.totalorder %s18, 4
      %s28 = sphi 0, %s30
      %s31 = sphi 0, %s28
      %s32 = sphi 0, %s31
      %s48 = sphi 0, %s32
      %s54 = sphi 0, %s56
      %s57 = sphi 0, %s54
      %s58 = sphi 0, %s57
      %s74 = sphi 0, %s58
      %s80 = sphi 0, %s82
      %s83 = sphi 0, %s80
      %s84 = sphi 0, %s83
      %s100 = sphi 0, %s84
      %s106 = sphi 0, %s108
      %s109 = sphi 0, %s106
      %s110 = sphi 0, %s109
      %s126 = sphi 0, %s110
    $region4: #{tpu_custom_call.1} parent=1 // loop_header_branch
      %21 = sbr.rel (%p19) target = $region8
    $region5: #{tpu_custom_call.1} parent=1 // loop_body
      %s23 = ssub.s32 %s18, 1
      %s24 = ssub.s32 %s18, 2
      %s25 = sadd.s32 %s18, 1
      %s26 = ssub.s32 %s18, %s25
      %p27 = scmp.eq.s32.totalorder %s26, 0
      %s29 = sadd.s32 %s28, 1
      %s30 = scalar_select %p27, %s28, %s29
      %p33 = pneg %p27
      %p34 = scmp.eq.s32.totalorder %s18, 1
      %p35 = por %p33, %p34
      %p36 = scmp.ne.s32.totalorder %s28, %s31
      %p37 = scmp.eq.s32.totalorder %s18, 0
      %p38 = por %p36, %p37
      %p39 = scmp.ne.s32.totalorder %s28, %s31
      %p40 = scmp.eq.s32.totalorder %s23, 1
      %p41 = por %p39, %p40
      %p42 = scmp.ne.s32.totalorder %s31, %s32
      %p43 = scmp.eq.s32.totalorder %s23, 0
      %p44 = por %p42, %p43
      %p45 = scmp.ne.s32.totalorder %s31, %s32
      %p46 = scmp.eq.s32.totalorder %s24, 1
      %p47 = por %p45, %p46
      %p49 = scmp.ne.s32.totalorder %s32, %s48
      %p50 = scmp.eq.s32.totalorder %s24, 0
      %p51 = por %p49, %p50
      %s52 = ssub.s32 %s18, %s25
      %p53 = scmp.eq.s32.totalorder %s52, 0
      %s55 = sadd.s32 %s54, 1
      %s56 = scalar_select %p53, %s54, %s55
      %p59 = pneg %p53
      %p60 = scmp.eq.s32.totalorder %s18, 1
      %p61 = por %p59, %p60
      %p62 = scmp.ne.s32.totalorder %s54, %s57
      %p63 = scmp.eq.s32.totalorder %s18, 0
      %p64 = por %p62, %p63
      %p65 = scmp.ne.s32.totalorder %s54, %s57
      %p66 = scmp.eq.s32.totalorder %s23, 1
      %p67 = por %p65, %p66
      %p68 = scmp.ne.s32.totalorder %s57, %s58
      %p69 = scmp.eq.s32.totalorder %s23, 0
      %p70 = por %p68, %p69
      %p71 = scmp.ne.s32.totalorder %s57, %s58
      %p72 = scmp.eq.s32.totalorder %s24, 1
      %p73 = por %p71, %p72
      %p75 = scmp.ne.s32.totalorder %s58, %s74
      %p76 = scmp.eq.s32.totalorder %s24, 0
      %p77 = por %p75, %p76
      %s78 = ssub.s32 %s18, %s25
      %p79 = scmp.eq.s32.totalorder %s78, 0
      %s81 = sadd.s32 %s80, 1
      %s82 = scalar_select %p79, %s80, %s81
      %p85 = pneg %p79
      %p86 = scmp.eq.s32.totalorder %s18, 1
      %p87 = por %p85, %p86
      %p88 = scmp.ne.s32.totalorder %s80, %s83
      %p89 = scmp.eq.s32.totalorder %s18, 0
      %p90 = por %p88, %p89
      %p91 = scmp.ne.s32.totalorder %s80, %s83
      %p92 = scmp.eq.s32.totalorder %s23, 1
      %p93 = por %p91, %p92
      %p94 = scmp.ne.s32.totalorder %s83, %s84
      %p95 = scmp.eq.s32.totalorder %s23, 0
      %p96 = por %p94, %p95
      %p97 = scmp.ne.s32.totalorder %s83, %s84
      %p98 = scmp.eq.s32.totalorder %s24, 1
      %p99 = por %p97, %p98
      %p101 = scmp.ne.s32.totalorder %s84, %s100
      %p102 = scmp.eq.s32.totalorder %s24, 0
      %p103 = por %p101, %p102
      %s104 = ssub.s32 %s18, %s25
      %p105 = scmp.eq.s32.totalorder %s104, 0
      %s107 = sadd.s32 %s106, 1
      %s108 = scalar_select %p105, %s106, %s107
      %p111 = pneg %p105
      %p112 = scmp.eq.s32.totalorder %s18, 1
      %p113 = por %p111, %p112
      %p114 = scmp.ne.s32.totalorder %s106, %s109
      %p115 = scmp.eq.s32.totalorder %s18, 0
      %p116 = por %p114, %p115
      %p117 = scmp.ne.s32.totalorder %s106, %s109
      %p118 = scmp.eq.s32.totalorder %s23, 1
      %p119 = por %p117, %p118
      %p120 = scmp.ne.s32.totalorder %s109, %s110
      %p121 = scmp.eq.s32.totalorder %s23, 0
      %p122 = por %p120, %p121
      %p123 = scmp.ne.s32.totalorder %s109, %s110
      %p124 = scmp.eq.s32.totalorder %s24, 1
      %p125 = por %p123, %p124
      %p127 = scmp.ne.s32.totalorder %s110, %s126
      %p128 = scmp.eq.s32.totalorder %s24, 0
      %p129 = por %p127, %p128
      %p130 = scmp.le.s32.totalorder 1, %s18
      %p131 = scmp.lt.s32.totalorder %s18, 3
      %p132 = pnand %p130, %p131
      %p133 = pneg %p132
      // Predicated region
      $region9: #{tpu_custom_call.1} parent=5 // pred_check
        _
      $region10: #{tpu_custom_call.1} parent=5 // pred_check_branch
        %135 = sbr.rel (%p132) target = $region12
      $region11: #{tpu_custom_call.1} parent=5 // pred_region
        %s136 = ssub.s32 %s18, 1
      $region12: #{tpu_custom_call.1} parent=5 // pred_fallthru
        _
      %p137 = scmp.lt.s32.totalorder %s18, 2
      // Predicated region
      $region13: #{tpu_custom_call.1} parent=5 // pred_check
        %p138 = pneg %p137
      $region14: #{tpu_custom_call.1} parent=5 // pred_check_branch
        %140 = sbr.rel (%p138) target = $region16
      $region15: #{tpu_custom_call.1} parent=5 // pred_region
        // Predicated region
        $region17: #{tpu_custom_call.1} parent=15 // pred_check
          %p141 = pneg %p38
        $region18: #{tpu_custom_call.1} parent=15 // pred_check_branch
          %143 = sbr.rel (%p141) target = $region20
        $region19: #{tpu_custom_call.1} parent=15 // pred_region
          %s144 = sand.u32 %s28, 1
          %s145 = scalar_lea.sflag [#allocation3], %s144
          %s146 = sand.u32 %s28, 1
          %s147 = smul.addr %s146, 8
          %s148 = scalar_lea.vmem [#allocation2], %s147
          %s150 = ssub.s32 128, 128
          %151 = vsyncadd %s145, %s150
          %s152 = smul.addr %s18, 128
          %s153 = scalar_lea.hbm %s0, %s152
          %s155 = sshll.u32 %s148, 4
          %s156 = int_to_ptr.vmem [resolvable:$true] %s155
          %158 = dma.hbm_to_vmem [thread:$0]  %s153, 128, %s156, %s145
        $region20: #{tpu_custom_call.1} parent=15 // pred_fallthru
          _
        // Predicated region
        $region21: #{tpu_custom_call.1} parent=15 // pred_check
          %p159 = pneg %p64
        $region22: #{tpu_custom_call.1} parent=15 // pred_check_branch
          %161 = sbr.rel (%p159) target = $region24
        $region23: #{tpu_custom_call.1} parent=15 // pred_region
          %s162 = sand.u32 %s18, 1
          %s163 = scalar_lea.sflag [#allocation6], %s162
          %s164 = sand.u32 %s54, 1
          %s165 = smul.addr %s164, 8
          %s166 = scalar_lea.vmem [#allocation5], %s165
          %s168 = ssub.s32 128, 128
          %169 = vsyncadd %s163, %s168
          %s170 = smul.addr %s18, 128
          %s171 = scalar_lea.hbm %s1, %s170
          %s173 = sshll.u32 %s166, 4
          %s174 = int_to_ptr.vmem [resolvable:$true] %s173
          %176 = dma.hbm_to_vmem [thread:$0]  %s171, 128, %s174, %s163
        $region24: #{tpu_custom_call.1} parent=15 // pred_fallthru
          _
        // Predicated region
        $region25: #{tpu_custom_call.1} parent=15 // pred_check
          %p177 = pneg %p90
        $region26: #{tpu_custom_call.1} parent=15 // pred_check_branch
          %179 = sbr.rel (%p177) target = $region28
        $region27: #{tpu_custom_call.1} parent=15 // pred_region
          %s180 = sand.u32 %s18, 1
          %s181 = scalar_lea.sflag [#allocation6], %s180
          %s182 = sand.u32 %s80, 1
          %s183 = smul.addr %s182, 8
          %s184 = scalar_lea.vmem [#allocation7], %s183
          %s186 = ssub.s32 128, 128
          %187 = vsyncadd %s181, %s186
          %s188 = smul.addr %s18, 128
          %s189 = scalar_lea.hbm %s2, %s188
          %s191 = sshll.u32 %s184, 4
          %s192 = int_to_ptr.vmem [resolvable:$true] %s191
          %194 = dma.hbm_to_vmem [thread:$0]  %s189, 128, %s192, %s181
        $region28: #{tpu_custom_call.1} parent=15 // pred_fallthru
          _
      $region16: #{tpu_custom_call.1} parent=5 // pred_fallthru
        _
      %p195 = scmp.le.s32.totalorder 1, %s18
      %p196 = scmp.lt.s32.totalorder %s18, 3
      %p197 = pnand %p195, %p196
      %p198 = pneg %p197
      // Predicated region
      $region29: #{tpu_custom_call.1} parent=5 // pred_check
        _
      $region30: #{tpu_custom_call.1} parent=5 // pred_check_branch
        %200 = sbr.rel (%p197) target = $region32
      $region31: #{tpu_custom_call.1} parent=5 // pred_region
        %s201 = ssub.s32 %s18, 1
        %s202 = sand.u32 %s31, 1
        %s203 = scalar_lea.sflag [#allocation3], %s202
        %s204 = sand.u32 %s31, 1
        %s205 = smul.addr %s204, 8
        %s206 = scalar_lea.vmem [#allocation2], %s205
        // Predicated region
        $region33: #{tpu_custom_call.1} parent=31 // pred_check
          %p207 = pneg %p44
        $region34: #{tpu_custom_call.1} parent=31 // pred_check_branch
          %209 = sbr.rel (%p207) target = $region36
        $region35: #{tpu_custom_call.1} parent=31 // pred_region
          %210 = dma.done %s203, 128
        $region36: #{tpu_custom_call.1} parent=31 // pred_fallthru
          _
        %s211 = sand.u32 %s23, 1
        %s212 = scalar_lea.sflag [#allocation6], %s211
        %s213 = sand.u32 %s57, 1
        %s214 = smul.addr %s213, 8
        %s215 = scalar_lea.vmem [#allocation5], %s214
        // Predicated region
        $region37: #{tpu_custom_call.1} parent=31 // pred_check
          %p216 = pneg %p70
        $region38: #{tpu_custom_call.1} parent=31 // pred_check_branch
          %218 = sbr.rel (%p216) target = $region40
        $region39: #{tpu_custom_call.1} parent=31 // pred_region
          %219 = dma.done %s212, 128
        $region40: #{tpu_custom_call.1} parent=31 // pred_fallthru
          _
        %s220 = sand.u32 %s23, 1
        %s221 = scalar_lea.sflag [#allocation6], %s220
        %s222 = sand.u32 %s83, 1
        %s223 = smul.addr %s222, 8
        %s224 = scalar_lea.vmem [#allocation7], %s223
        // Predicated region
        $region41: #{tpu_custom_call.1} parent=31 // pred_check
          %p225 = pneg %p96
        $region42: #{tpu_custom_call.1} parent=31 // pred_check_branch
          %227 = sbr.rel (%p225) target = $region44
        $region43: #{tpu_custom_call.1} parent=31 // pred_region
          %228 = dma.done %s221, 128
        $region44: #{tpu_custom_call.1} parent=31 // pred_fallthru
          _
        %s229 = sand.u32 %s31, 1
        %s230 = scalar_lea.sflag [#allocation3], %s229
        %s231 = sand.u32 %s31, 1
        %s232 = smul.addr %s231, 8
        %s233 = scalar_lea.vmem [#allocation2], %s232
        %p234 = pneg %p44
        %p235 = pneg %p41
        %s236 = sand.u32 %s23, 1
        %s237 = scalar_lea.sflag [#allocation6], %s236
        %s238 = sand.u32 %s57, 1
        %s239 = smul.addr %s238, 8
        %s240 = scalar_lea.vmem [#allocation5], %s239
        %p241 = pneg %p70
        %p242 = pneg %p67
        %s243 = sand.u32 %s23, 1
        %s244 = scalar_lea.sflag [#allocation6], %s243
        %s245 = sand.u32 %s83, 1
        %s246 = smul.addr %s245, 8
        %s247 = scalar_lea.vmem [#allocation7], %s246
        %p248 = pneg %p96
        %p249 = pneg %p93
        %p250 = pneg %p122
        %p251 = pneg %p119
        %s252 = sand.u32 %s109, 1
        %s253 = scalar_lea.sflag [#allocation4], %s252
        %s254 = sand.u32 %s109, 1
        %s255 = smul.addr %s254, 8
        %s256 = scalar_lea.vmem [#allocation8], %s255
        %v258 = vld [vmem:[%s206] sm:$0xff]
        %v259 = vmul.f32 %v258, 0.35355338
        %v260 = vpack.c.bf16 %v259, %v259
        %262 = vrot.lane.b32.xlu0 %v260, 120
        %v263 = vpop.permute.xlu0 %262
        %264 = vrot.lane.b32.xlu0 %v260, 112
        %v265 = vpop.permute.xlu0 %264
        %266 = vrot.lane.b32.xlu0 %v260, 104
        %v267 = vpop.permute.xlu0 %266
        %v269 = vunpack.c.l.s4 1983009808
        %v270 = vunpack.c.0.s8 %v269
        %v271 = vlaneseq
        %v272 = vshrl.u32 %v271, 7
        %v273 = vsub.s32 %v270, %v272
        %v274 = vrot.slane %v260, %v273
        %v277 = vunpack.c.l.s4 1983009808
        %v278 = vunpack.c.0.s8 %v277
        %v279 = vlaneseq
        %v280 = vshrl.u32 %v279, 7
        %v281 = vsub.s32 %v278, %v280
        %v282 = vrot.slane %v265, %v281
        %v283 = vcombine.low %v274, %v282
        %v284 = vcombine.high %v274, %v282
        %v286 = vunpack.c.l.s4 1934713408
        %v287 = vunpack.c.0.s8 %v286
        %v288 = vlaneseq
        %v289 = vshrl.u32 %v288, 7
        %v290 = vsub.s32 %v287, %v289
        %v291 = vrot.slane %v283, %v290
        %v293 = vunpack.c.l.s4 1934713408
        %v294 = vunpack.c.0.s8 %v293
        %v295 = vlaneseq
        %v296 = vshrl.u32 %v295, 7
        %v297 = vsub.s32 %v294, %v296
        %v298 = vrot.slane %v284, %v297
        %v299 = vcombine.high %v291, 0
        %v300 = vcombine.high %v298, 0
        %v303 = vunpack.c.l.s4 1983009808
        %v304 = vunpack.c.0.s8 %v303
        %v305 = vlaneseq
        %v306 = vshrl.u32 %v305, 7
        %v307 = vsub.s32 %v304, %v306
        %v308 = vrot.slane %v263, %v307
        %v311 = vunpack.c.l.s4 1983009808
        %v312 = vunpack.c.0.s8 %v311
        %v313 = vlaneseq
        %v314 = vshrl.u32 %v313, 7
        %v315 = vsub.s32 %v312, %v314
        %v316 = vrot.slane %v267, %v315
        %v317 = vcombine.low %v308, %v316
        %v318 = vcombine.high %v308, %v316
        %v320 = vunpack.c.l.s4 1934713408
        %v321 = vunpack.c.0.s8 %v320
        %v322 = vlaneseq
        %v323 = vshrl.u32 %v322, 7
        %v324 = vsub.s32 %v321, %v323
        %v325 = vrot.slane %v317, %v324
        %v327 = vunpack.c.l.s4 1934713408
        %v328 = vunpack.c.0.s8 %v327
        %v329 = vlaneseq
        %v330 = vshrl.u32 %v329, 7
        %v331 = vsub.s32 %v328, %v330
        %v332 = vrot.slane %v318, %v331
        %v333 = vcombine.high %v325, 0
        %v334 = vcombine.high %v332, 0
        %v337 = vpack.i.b16 %v325, %v291
        %v339 = vshrl.u32 %v291, 16
        %v340 = vshrl.u32 %v325, 16
        %v341 = vpack.i.b16 %v340, %v339
        %v345 = vpack.i.b16 %v333, %v299
        %v347 = vshrl.u32 %v299, 16
        %v348 = vshrl.u32 %v333, 16
        %v349 = vpack.i.b16 %v348, %v347
        %v353 = vpack.i.b16 %v332, %v298
        %v355 = vshrl.u32 %v298, 16
        %v356 = vshrl.u32 %v332, 16
        %v357 = vpack.i.b16 %v356, %v355
        %v361 = vpack.i.b16 %v334, %v300
        %v363 = vshrl.u32 %v300, 16
        %v364 = vshrl.u32 %v334, 16
        %v365 = vpack.i.b16 %v364, %v363
        %v367 = vcombine.low %v337, %v353
        %v369 = vunpack.c.l.s4 1983009808
        %v370 = vunpack.c.0.s8 %v369
        %v371 = vlaneseq
        %v372 = vshrl.u32 %v371, 7
        %v373 = vsub.s32 %v370, %v372
        %v374 = vrot.slane %v367, %v373
        %v375 = vcombine.low %v345, %v361
        %v377 = vunpack.c.l.s4 1983009808
        %v378 = vunpack.c.0.s8 %v377
        %v379 = vlaneseq
        %v380 = vshrl.u32 %v379, 7
        %v381 = vsub.s32 %v378, %v380
        %v382 = vrot.slane %v375, %v381
        %v383 = vcombine.low %v374, %v382
        %v385 = vunpack.c.l.s4 1934713408
        %v386 = vunpack.c.0.s8 %v385
        %v387 = vlaneseq
        %v388 = vshrl.u32 %v387, 7
        %v389 = vsub.s32 %v386, %v388
        %v390 = vrot.slane %v383, %v389
        %v391 = vcombine.high %v390, 0
        %v392 = vcombine.low %v341, %v357
        %v394 = vunpack.c.l.s4 1983009808
        %v395 = vunpack.c.0.s8 %v394
        %v396 = vlaneseq
        %v397 = vshrl.u32 %v396, 7
        %v398 = vsub.s32 %v395, %v397
        %v399 = vrot.slane %v392, %v398
        %v400 = vcombine.low %v349, %v365
        %v402 = vunpack.c.l.s4 1983009808
        %v403 = vunpack.c.0.s8 %v402
        %v404 = vlaneseq
        %v405 = vshrl.u32 %v404, 7
        %v406 = vsub.s32 %v403, %v405
        %v407 = vrot.slane %v400, %v406
        %v408 = vcombine.low %v399, %v407
        %v410 = vunpack.c.l.s4 1934713408
        %v411 = vunpack.c.0.s8 %v410
        %v412 = vlaneseq
        %v413 = vshrl.u32 %v412, 7
        %v414 = vsub.s32 %v411, %v413
        %v415 = vrot.slane %v408, %v414
        %v416 = vcombine.high %v415, 0
        %v419 = vpack.i.b16 %v415, %v390
        %v420 = vshrl.u32 %v390, 16
        %v421 = vshrl.u32 %v415, 16
        %v422 = vpack.i.b16 %v421, %v420
        %v425 = vpack.i.b16 %v416, %v391
        %v426 = vshrl.u32 %v391, 16
        %v427 = vshrl.u32 %v416, 16
        %v428 = vpack.i.b16 %v427, %v426
        %v429 = vld [vmem:[%s215] sm:$0xff]
        %v430 = vpack.c.bf16 %v429, %v429
        %432 = vrot.lane.b32.xlu0 %v430, 120
        %v433 = vpop.permute.xlu0 %432
        %434 = vrot.lane.b32.xlu0 %v430, 112
        %v435 = vpop.permute.xlu0 %434
        %436 = vrot.lane.b32.xlu0 %v430, 104
        %v437 = vpop.permute.xlu0 %436
        %v439 = vunpack.c.l.s4 1983009808
        %v440 = vunpack.c.0.s8 %v439
        %v441 = vlaneseq
        %v442 = vshrl.u32 %v441, 7
        %v443 = vsub.s32 %v440, %v442
        %v444 = vrot.slane %v430, %v443
        %v447 = vunpack.c.l.s4 1983009808
        %v448 = vunpack.c.0.s8 %v447
        %v449 = vlaneseq
        %v450 = vshrl.u32 %v449, 7
        %v451 = vsub.s32 %v448, %v450
        %v452 = vrot.slane %v435, %v451
        %v453 = vcombine.low %v444, %v452
        %v454 = vcombine.high %v444, %v452
        %v456 = vunpack.c.l.s4 1934713408
        %v457 = vunpack.c.0.s8 %v456
        %v458 = vlaneseq
        %v459 = vshrl.u32 %v458, 7
        %v460 = vsub.s32 %v457, %v459
        %v461 = vrot.slane %v453, %v460
        %v463 = vunpack.c.l.s4 1934713408
        %v464 = vunpack.c.0.s8 %v463
        %v465 = vlaneseq
        %v466 = vshrl.u32 %v465, 7
        %v467 = vsub.s32 %v464, %v466
        %v468 = vrot.slane %v454, %v467
        %v469 = vcombine.high %v461, 0
        %v470 = vcombine.high %v468, 0
        %v473 = vunpack.c.l.s4 1983009808
        %v474 = vunpack.c.0.s8 %v473
        %v475 = vlaneseq
        %v476 = vshrl.u32 %v475, 7
        %v477 = vsub.s32 %v474, %v476
        %v478 = vrot.slane %v433, %v477
        %v481 = vunpack.c.l.s4 1983009808
        %v482 = vunpack.c.0.s8 %v481
        %v483 = vlaneseq
        %v484 = vshrl.u32 %v483, 7
        %v485 = vsub.s32 %v482, %v484
        %v486 = vrot.slane %v437, %v485
        %v487 = vcombine.low %v478, %v486
        %v488 = vcombine.high %v478, %v486
        %v490 = vunpack.c.l.s4 1934713408
        %v491 = vunpack.c.0.s8 %v490
        %v492 = vlaneseq
        %v493 = vshrl.u32 %v492, 7
        %v494 = vsub.s32 %v491, %v493
        %v495 = vrot.slane %v487, %v494
        %v497 = vunpack.c.l.s4 1934713408
        %v498 = vunpack.c.0.s8 %v497
        %v499 = vlaneseq
        %v500 = vshrl.u32 %v499, 7
        %v501 = vsub.s32 %v498, %v500
        %v502 = vrot.slane %v488, %v501
        %v503 = vcombine.high %v495, 0
        %v504 = vcombine.high %v502, 0
        %v507 = vpack.i.b16 %v495, %v461
        %v509 = vshrl.u32 %v461, 16
        %v510 = vshrl.u32 %v495, 16
        %v511 = vpack.i.b16 %v510, %v509
        %v515 = vpack.i.b16 %v503, %v469
        %v517 = vshrl.u32 %v469, 16
        %v518 = vshrl.u32 %v503, 16
        %v519 = vpack.i.b16 %v518, %v517
        %v523 = vpack.i.b16 %v502, %v468
        %v525 = vshrl.u32 %v468, 16
        %v526 = vshrl.u32 %v502, 16
        %v527 = vpack.i.b16 %v526, %v525
        %v531 = vpack.i.b16 %v504, %v470
        %v533 = vshrl.u32 %v470, 16
        %v534 = vshrl.u32 %v504, 16
        %v535 = vpack.i.b16 %v534, %v533
        %v537 = vcombine.low %v507, %v523
        %v539 = vunpack.c.l.s4 1983009808
        %v540 = vunpack.c.0.s8 %v539
        %v541 = vlaneseq
        %v542 = vshrl.u32 %v541, 7
        %v543 = vsub.s32 %v540, %v542
        %v544 = vrot.slane %v537, %v543
        %v545 = vcombine.low %v515, %v531
        %v547 = vunpack.c.l.s4 1983009808
        %v548 = vunpack.c.0.s8 %v547
        %v549 = vlaneseq
        %v550 = vshrl.u32 %v549, 7
        %v551 = vsub.s32 %v548, %v550
        %v552 = vrot.slane %v545, %v551
        %v553 = vcombine.low %v544, %v552
        %v555 = vunpack.c.l.s4 1934713408
        %v556 = vunpack.c.0.s8 %v555
        %v557 = vlaneseq
        %v558 = vshrl.u32 %v557, 7
        %v559 = vsub.s32 %v556, %v558
        %v560 = vrot.slane %v553, %v559
        %v561 = vcombine.high %v560, 0
        %v562 = vcombine.low %v511, %v527
        %v564 = vunpack.c.l.s4 1983009808
        %v565 = vunpack.c.0.s8 %v564
        %v566 = vlaneseq
        %v567 = vshrl.u32 %v566, 7
        %v568 = vsub.s32 %v565, %v567
        %v569 = vrot.slane %v562, %v568
        %v570 = vcombine.low %v519, %v535
        %v572 = vunpack.c.l.s4 1983009808
        %v573 = vunpack.c.0.s8 %v572
        %v574 = vlaneseq
        %v575 = vshrl.u32 %v574, 7
        %v576 = vsub.s32 %v573, %v575
        %v577 = vrot.slane %v570, %v576
        %v578 = vcombine.low %v569, %v577
        %v580 = vunpack.c.l.s4 1934713408
        %v581 = vunpack.c.0.s8 %v580
        %v582 = vlaneseq
        %v583 = vshrl.u32 %v582, 7
        %v584 = vsub.s32 %v581, %v583
        %v585 = vrot.slane %v578, %v584
        %v586 = vcombine.high %v585, 0
        %v589 = vpack.i.b16 %v585, %v560
        %v590 = vshrl.u32 %v560, 16
        %v591 = vshrl.u32 %v585, 16
        %v592 = vpack.i.b16 %v591, %v590
        %v595 = vpack.i.b16 %v586, %v561
        %v596 = vshrl.u32 %v561, 16
        %v597 = vshrl.u32 %v586, 16
        %v598 = vpack.i.b16 %v597, %v596
        %v599 = vld [vmem:[%s224] sm:$0xff]
        %v600 = vpack.c.bf16 %v599, %v599
        %602 = vrot.lane.b32.xlu0 %v600, 120
        %v603 = vpop.permute.xlu0 %602
        %604 = vrot.lane.b32.xlu0 %v600, 112
        %v605 = vpop.permute.xlu0 %604
        %606 = vrot.lane.b32.xlu0 %v600, 104
        %v607 = vpop.permute.xlu0 %606
        %v609 = vunpack.c.l.s4 1983009808
        %v610 = vunpack.c.0.s8 %v609
        %v611 = vlaneseq
        %v612 = vshrl.u32 %v611, 7
        %v613 = vsub.s32 %v610, %v612
        %v614 = vrot.slane %v600, %v613
        %v617 = vunpack.c.l.s4 1983009808
        %v618 = vunpack.c.0.s8 %v617
        %v619 = vlaneseq
        %v620 = vshrl.u32 %v619, 7
        %v621 = vsub.s32 %v618, %v620
        %v622 = vrot.slane %v605, %v621
        %v623 = vcombine.low %v614, %v622
        %v624 = vcombine.high %v614, %v622
        %v626 = vunpack.c.l.s4 1934713408
        %v627 = vunpack.c.0.s8 %v626
        %v628 = vlaneseq
        %v629 = vshrl.u32 %v628, 7
        %v630 = vsub.s32 %v627, %v629
        %v631 = vrot.slane %v623, %v630
        %v633 = vunpack.c.l.s4 1934713408
        %v634 = vunpack.c.0.s8 %v633
        %v635 = vlaneseq
        %v636 = vshrl.u32 %v635, 7
        %v637 = vsub.s32 %v634, %v636
        %v638 = vrot.slane %v624, %v637
        %v639 = vcombine.high %v631, 0
        %v640 = vcombine.high %v638, 0
        %v643 = vunpack.c.l.s4 1983009808
        %v644 = vunpack.c.0.s8 %v643
        %v645 = vlaneseq
        %v646 = vshrl.u32 %v645, 7
        %v647 = vsub.s32 %v644, %v646
        %v648 = vrot.slane %v603, %v647
        %v651 = vunpack.c.l.s4 1983009808
        %v652 = vunpack.c.0.s8 %v651
        %v653 = vlaneseq
        %v654 = vshrl.u32 %v653, 7
        %v655 = vsub.s32 %v652, %v654
        %v656 = vrot.slane %v607, %v655
        %v657 = vcombine.low %v648, %v656
        %v658 = vcombine.high %v648, %v656
        %v660 = vunpack.c.l.s4 1934713408
        %v661 = vunpack.c.0.s8 %v660
        %v662 = vlaneseq
        %v663 = vshrl.u32 %v662, 7
        %v664 = vsub.s32 %v661, %v663
        %v665 = vrot.slane %v657, %v664
        %v667 = vunpack.c.l.s4 1934713408
        %v668 = vunpack.c.0.s8 %v667
        %v669 = vlaneseq
        %v670 = vshrl.u32 %v669, 7
        %v671 = vsub.s32 %v668, %v670
        %v672 = vrot.slane %v658, %v671
        %v673 = vcombine.high %v665, 0
        %v674 = vcombine.high %v672, 0
        %v677 = vpack.i.b16 %v665, %v631
        %v679 = vshrl.u32 %v631, 16
        %v680 = vshrl.u32 %v665, 16
        %v681 = vpack.i.b16 %v680, %v679
        %v685 = vpack.i.b16 %v673, %v639
        %v687 = vshrl.u32 %v639, 16
        %v688 = vshrl.u32 %v673, 16
        %v689 = vpack.i.b16 %v688, %v687
        %v693 = vpack.i.b16 %v672, %v638
        %v695 = vshrl.u32 %v638, 16
        %v696 = vshrl.u32 %v672, 16
        %v697 = vpack.i.b16 %v696, %v695
        %v701 = vpack.i.b16 %v674, %v640
        %v703 = vshrl.u32 %v640, 16
        %v704 = vshrl.u32 %v674, 16
        %v705 = vpack.i.b16 %v704, %v703
        %v707 = vcombine.low %v677, %v693
        %v709 = vunpack.c.l.s4 1983009808
        %v710 = vunpack.c.0.s8 %v709
        %v711 = vlaneseq
        %v712 = vshrl.u32 %v711, 7
        %v713 = vsub.s32 %v710, %v712
        %v714 = vrot.slane %v707, %v713
        %v715 = vcombine.low %v685, %v701
        %v717 = vunpack.c.l.s4 1983009808
        %v718 = vunpack.c.0.s8 %v717
        %v719 = vlaneseq
        %v720 = vshrl.u32 %v719, 7
        %v721 = vsub.s32 %v718, %v720
        %v722 = vrot.slane %v715, %v721
        %v723 = vcombine.low %v714, %v722
        %v725 = vunpack.c.l.s4 1934713408
        %v726 = vunpack.c.0.s8 %v725
        %v727 = vlaneseq
        %v728 = vshrl.u32 %v727, 7
        %v729 = vsub.s32 %v726, %v728
        %v730 = vrot.slane %v723, %v729
        %v731 = vcombine.high %v730, 0
        %v732 = vcombine.low %v681, %v697
        %v734 = vunpack.c.l.s4 1983009808
        %v735 = vunpack.c.0.s8 %v734
        %v736 = vlaneseq
        %v737 = vshrl.u32 %v736, 7
        %v738 = vsub.s32 %v735, %v737
        %v739 = vrot.slane %v732, %v738
        %v740 = vcombine.low %v689, %v705
        %v742 = vunpack.c.l.s4 1983009808
        %v743 = vunpack.c.0.s8 %v742
        %v744 = vlaneseq
        %v745 = vshrl.u32 %v744, 7
        %v746 = vsub.s32 %v743, %v745
        %v747 = vrot.slane %v740, %v746
        %v748 = vcombine.low %v739, %v747
        %v750 = vunpack.c.l.s4 1934713408
        %v751 = vunpack.c.0.s8 %v750
        %v752 = vlaneseq
        %v753 = vshrl.u32 %v752, 7
        %v754 = vsub.s32 %v751, %v753
        %v755 = vrot.slane %v748, %v754
        %v756 = vcombine.high %v755, 0
        %v759 = vpack.i.b16 %v755, %v730
        %v760 = vshrl.u32 %v730, 16
        %v761 = vshrl.u32 %v755, 16
        %v762 = vpack.i.b16 %v761, %v760
        %v765 = vpack.i.b16 %v756, %v731
        %v766 = vshrl.u32 %v731, 16
        %v767 = vshrl.u32 %v756, 16
        %v768 = vpack.i.b16 %v767, %v766
        %vm769 = vcmask 64512
        %v771 = vsel %vm769, %v419, 0
        %v774 = vsel %vm769, %v589, 0
        %776 = vmatprep.subr.bf16.mxu0 0
        %777 = vmatpush1.bf16.xpose.msra.mxu0 0
        %778 = vmatprep.subr.bf16.mxu0 0
        %779 = vmatpush1.bf16.xpose.msra.mxu0 0
        %780 = vmatprep.subr.bf16.mxu0 0
        %781 = vmatpush1.bf16.xpose.msra.mxu0 0
        %782 = vmatprep.subr.bf16.mxu0 0
        %783 = vmatpush1.bf16.xpose.msra.mxu0 0
        %784 = vmatprep.subr.bf16.mxu0 0
        %785 = vmatpush1.bf16.xpose.msra.mxu0 0
        %786 = vmatprep.subr.bf16.mxu0 0
        %787 = vmatpush1.bf16.xpose.msra.mxu0 0
        %788 = vmatprep.subr.bf16.mxu0 0
        %789 = vmatpush1.bf16.xpose.msra.mxu0 0
        %790 = vmatprep.subr.bf16.mxu0 0
        %791 = vmatpush1.bf16.xpose.msra.mxu0 %v774
        %792 = vmatprep.subr.bf16.mxu0 0
        %793 = vmatpush2.bf16.xpose.msra.mxu0 0
        %794 = vmatprep.subr.bf16.mxu0 0
        %795 = vmatpush2.bf16.xpose.msra.mxu0 0
        %796 = vmatprep.subr.bf16.mxu0 0
        %797 = vmatpush2.bf16.xpose.msra.mxu0 0
        %798 = vmatprep.subr.bf16.mxu0 0
        %799 = vmatpush2.bf16.xpose.msra.mxu0 0
        %800 = vmatprep.subr.bf16.mxu0 0
        %801 = vmatpush2.bf16.xpose.msra.mxu0 0
        %802 = vmatprep.subr.bf16.mxu0 0
        %803 = vmatpush2.bf16.xpose.msra.mxu0 0
        %804 = vmatprep.subr.bf16.mxu0 0
        %805 = vmatpush2.bf16.xpose.msra.mxu0 0
        %806 = vmatprep.subr.bf16.mxu0 0
        %807 = vmatpush2.bf16.xpose.msra.mxu0 0
        %808 = vmatprep.mubr.bf16.mxu0 0
        %809 = vmatmul.mubr.bf16.gmra.mxu0 %v771
        %v810 = vpop.f32.mrf.mxu0
        %v811 = vadd.f32 0.0, %v810
        %v812 = vpop.f32.mrf.mxu0
        %v813 = vpop.f32.mrf.mxu0
        %v814 = vpop.f32.mrf.mxu0
        %815 = vdwg.mxu0
        %v817 = vsel %vm769, %v422, 0
        %v820 = vsel %vm769, %v592, 0
        %822 = vmatprep.subr.bf16.mxu0 0
        %823 = vmatpush1.bf16.xpose.msra.mxu0 0
        %824 = vmatprep.subr.bf16.mxu0 0
        %825 = vmatpush1.bf16.xpose.msra.mxu0 0
        %826 = vmatprep.subr.bf16.mxu0 0
        %827 = vmatpush1.bf16.xpose.msra.mxu0 0
        %828 = vmatprep.subr.bf16.mxu0 0
        %829 = vmatpush1.bf16.xpose.msra.mxu0 0
        %830 = vmatprep.subr.bf16.mxu0 0
        %831 = vmatpush1.bf16.xpose.msra.mxu0 0
        %832 = vmatprep.subr.bf16.mxu0 0
        %833 = vmatpush1.bf16.xpose.msra.mxu0 0
        %834 = vmatprep.subr.bf16.mxu0 0
        %835 = vmatpush1.bf16.xpose.msra.mxu0 0
        %836 = vmatprep.subr.bf16.mxu0 0
        %837 = vmatpush1.bf16.xpose.msra.mxu0 %v820
        %838 = vmatprep.subr.bf16.mxu0 0
        %839 = vmatpush2.bf16.xpose.msra.mxu0 0
        %840 = vmatprep.subr.bf16.mxu0 0
        %841 = vmatpush2.bf16.xpose.msra.mxu0 0
        %842 = vmatprep.subr.bf16.mxu0 0
        %843 = vmatpush2.bf16.xpose.msra.mxu0 0
        %844 = vmatprep.subr.bf16.mxu0 0
        %845 = vmatpush2.bf16.xpose.msra.mxu0 0
        %846 = vmatprep.subr.bf16.mxu0 0
        %847 = vmatpush2.bf16.xpose.msra.mxu0 0
        %848 = vmatprep.subr.bf16.mxu0 0
        %849 = vmatpush2.bf16.xpose.msra.mxu0 0
        %850 = vmatprep.subr.bf16.mxu0 0
        %851 = vmatpush2.bf16.xpose.msra.mxu0 0
        %852 = vmatprep.subr.bf16.mxu0 0
        %853 = vmatpush2.bf16.xpose.msra.mxu0 0
        %854 = vmatprep.mubr.bf16.mxu0 0
        %855 = vmatmul.mubr.bf16.gmra.mxu0 %v817
        %v856 = vpop.f32.mrf.mxu0
        %v857 = vadd.f32 0.0, %v856
        %v858 = vpop.f32.mrf.mxu0
        %v859 = vpop.f32.mrf.mxu0
        %v860 = vpop.f32.mrf.mxu0
        %861 = vdwg.mxu0
        %v863 = vsel %vm769, %v425, 0
        %v866 = vsel %vm769, %v595, 0
        %868 = vmatprep.subr.bf16.mxu0 0
        %869 = vmatpush1.bf16.xpose.msra.mxu0 0
        %870 = vmatprep.subr.bf16.mxu0 0
        %871 = vmatpush1.bf16.xpose.msra.mxu0 0
        %872 = vmatprep.subr.bf16.mxu0 0
        %873 = vmatpush1.bf16.xpose.msra.mxu0 0
        %874 = vmatprep.subr.bf16.mxu0 0
        %875 = vmatpush1.bf16.xpose.msra.mxu0 0
        %876 = vmatprep.subr.bf16.mxu0 0
        %877 = vmatpush1.bf16.xpose.msra.mxu0 0
        %878 = vmatprep.subr.bf16.mxu0 0
        %879 = vmatpush1.bf16.xpose.msra.mxu0 0
        %880 = vmatprep.subr.bf16.mxu0 0
        %881 = vmatpush1.bf16.xpose.msra.mxu0 0
        %882 = vmatprep.subr.bf16.mxu0 0
        %883 = vmatpush1.bf16.xpose.msra.mxu0 %v866
        %884 = vmatprep.subr.bf16.mxu0 0
        %885 = vmatpush2.bf16.xpose.msra.mxu0 0
        %886 = vmatprep.subr.bf16.mxu0 0
        %887 = vmatpush2.bf16.xpose.msra.mxu0 0
        %888 = vmatprep.subr.bf16.mxu0 0
        %889 = vmatpush2.bf16.xpose.msra.mxu0 0
        %890 = vmatprep.subr.bf16.mxu0 0
        %891 = vmatpush2.bf16.xpose.msra.mxu0 0
        %892 = vmatprep.subr.bf16.mxu0 0
        %893 = vmatpush2.bf16.xpose.msra.mxu0 0
        %894 = vmatprep.subr.bf16.mxu0 0
        %895 = vmatpush2.bf16.xpose.msra.mxu0 0
        %896 = vmatprep.subr.bf16.mxu0 0
        %897 = vmatpush2.bf16.xpose.msra.mxu0 0
        %898 = vmatprep.subr.bf16.mxu0 0
        %899 = vmatpush2.bf16.xpose.msra.mxu0 0
        %900 = vmatprep.mubr.bf16.mxu0 0
        %901 = vmatmul.mubr.bf16.gmra.mxu0 %v863
        %v902 = vpop.f32.mrf.mxu0
        %v903 = vadd.f32 0.0, %v902
        %v904 = vpop.f32.mrf.mxu0
        %v905 = vpop.f32.mrf.mxu0
        %v906 = vpop.f32.mrf.mxu0
        %907 = vdwg.mxu0
        %v909 = vsel %vm769, %v428, 0
        %v912 = vsel %vm769, %v598, 0
        %914 = vmatprep.subr.bf16.mxu0 0
        %915 = vmatpush1.bf16.xpose.msra.mxu0 0
        %916 = vmatprep.subr.bf16.mxu0 0
        %917 = vmatpush1.bf16.xpose.msra.mxu0 0
        %918 = vmatprep.subr.bf16.mxu0 0
        %919 = vmatpush1.bf16.xpose.msra.mxu0 0
        %920 = vmatprep.subr.bf16.mxu0 0
        %921 = vmatpush1.bf16.xpose.msra.mxu0 0
        %922 = vmatprep.subr.bf16.mxu0 0
        %923 = vmatpush1.bf16.xpose.msra.mxu0 0
        %924 = vmatprep.subr.bf16.mxu0 0
        %925 = vmatpush1.bf16.xpose.msra.mxu0 0
        %926 = vmatprep.subr.bf16.mxu0 0
        %927 = vmatpush1.bf16.xpose.msra.mxu0 0
        %928 = vmatprep.subr.bf16.mxu0 0
        %929 = vmatpush1.bf16.xpose.msra.mxu0 %v912
        %930 = vmatprep.subr.bf16.mxu0 0
        %931 = vmatpush2.bf16.xpose.msra.mxu0 0
        %932 = vmatprep.subr.bf16.mxu0 0
        %933 = vmatpush2.bf16.xpose.msra.mxu0 0
        %934 = vmatprep.subr.bf16.mxu0 0
        %935 = vmatpush2.bf16.xpose.msra.mxu0 0
        %936 = vmatprep.subr.bf16.mxu0 0
        %937 = vmatpush2.bf16.xpose.msra.mxu0 0
        %938 = vmatprep.subr.bf16.mxu0 0
        %939 = vmatpush2.bf16.xpose.msra.mxu0 0
        %940 = vmatprep.subr.bf16.mxu0 0
        %941 = vmatpush2.bf16.xpose.msra.mxu0 0
        %942 = vmatprep.subr.bf16.mxu0 0
        %943 = vmatpush2.bf16.xpose.msra.mxu0 0
        %944 = vmatprep.subr.bf16.mxu0 0
        %945 = vmatpush2.bf16.xpose.msra.mxu0 0
        %946 = vmatprep.mubr.bf16.mxu0 0
        %947 = vmatmul.mubr.bf16.gmra.mxu0 %v909
        %v948 = vpop.f32.mrf.mxu0
        %v949 = vadd.f32 0.0, %v948
        %v950 = vpop.f32.mrf.mxu0
        %v951 = vpop.f32.mrf.mxu0
        %v952 = vpop.f32.mrf.mxu0
        %953 = vdwg.mxu0
        %v954 = vsel %vm769, %v811, -inf
        %955 = vmax.xlane.f32.xlu0 %v954
        %v956 = vpop.xlane.xlu0 %955
        %v957 = vsel %vm769, %v857, -inf
        %958 = vmax.xlane.f32.xlu0 %v957
        %v959 = vpop.xlane.xlu0 %958
        %v960 = vsel %vm769, %v903, -inf
        %961 = vmax.xlane.f32.xlu0 %v960
        %v962 = vpop.xlane.xlu0 %961
        %v963 = vsel %vm769, %v949, -inf
        %964 = vmax.xlane.f32.xlu0 %v963
        %v965 = vpop.xlane.xlu0 %964
        %v966 = vsub.f32 %v811, %v956
        %v967 = vsub.f32 %v857, %v959
        %v968 = vsub.f32 %v903, %v962
        %v969 = vsub.f32 %v949, %v965
        %v970 = vmul.f32 %v966, 1.442695
        %v971 = vpow.pop %v970
        %v972 = vmul.f32 %v967, 1.442695
        %v973 = vpow.pop %v972
        %v974 = vmul.f32 %v968, 1.442695
        %v975 = vpow.pop %v974
        %v976 = vmul.f32 %v969, 1.442695
        %v977 = vpow.pop %v976
        %v978 = vsel %vm769, %v971, 0.0
        %979 = vadd.xlane.f32.xlu0 %v978
        %v980 = vpop.xlane.xlu0 %979
        %v981 = vsel %vm769, %v973, 0.0
        %982 = vadd.xlane.f32.xlu0 %v981
        %v983 = vpop.xlane.xlu0 %982
        %v984 = vsel %vm769, %v975, 0.0
        %985 = vadd.xlane.f32.xlu0 %v984
        %v986 = vpop.xlane.xlu0 %985
        %v987 = vsel %vm769, %v977, 0.0
        %988 = vadd.xlane.f32.xlu0 %v987
        %v989 = vpop.xlane.xlu0 %988
        %v990 = vpack.c.bf16 %v971, %v971
        %v991 = vpack.c.bf16 %v973, %v973
        %v992 = vpack.c.bf16 %v975, %v975
        %v993 = vpack.c.bf16 %v977, %v977
        %v995 = vsel %vm769, %v990, 0
        %vm997 = vcmask 1043456
        %v999 = vsel %vm997, %v759, 0
        %1001 = vmatprep.subr.bf16.mxu0 0
        %1002 = vmatpush1.bf16.msra.mxu0 0
        %1003 = vmatprep.subr.bf16.mxu0 0
        %1004 = vmatpush1.bf16.msra.mxu0 0
        %1005 = vmatprep.subr.bf16.mxu0 0
        %1006 = vmatpush1.bf16.msra.mxu0 0
        %1007 = vmatprep.subr.bf16.mxu0 0
        %1008 = vmatpush1.bf16.msra.mxu0 0
        %1009 = vmatprep.subr.bf16.mxu0 0
        %1010 = vmatpush1.bf16.msra.mxu0 0
        %1011 = vmatprep.subr.bf16.mxu0 0
        %1012 = vmatpush1.bf16.msra.mxu0 0
        %1013 = vmatprep.subr.bf16.mxu0 0
        %1014 = vmatpush1.bf16.msra.mxu0 0
        %1015 = vmatprep.subr.bf16.mxu0 0
        %1016 = vmatpush1.bf16.msra.mxu0 %v999
        %1017 = vmatprep.subr.bf16.mxu0 0
        %1018 = vmatpush2.bf16.msra.mxu0 0
        %1019 = vmatprep.subr.bf16.mxu0 0
        %1020 = vmatpush2.bf16.msra.mxu0 0
        %1021 = vmatprep.subr.bf16.mxu0 0
        %1022 = vmatpush2.bf16.msra.mxu0 0
        %1023 = vmatprep.subr.bf16.mxu0 0
        %1024 = vmatpush2.bf16.msra.mxu0 0
        %1025 = vmatprep.subr.bf16.mxu0 0
        %1026 = vmatpush2.bf16.msra.mxu0 0
        %1027 = vmatprep.subr.bf16.mxu0 0
        %1028 = vmatpush2.bf16.msra.mxu0 0
        %1029 = vmatprep.subr.bf16.mxu0 0
        %1030 = vmatpush2.bf16.msra.mxu0 0
        %1031 = vmatprep.subr.bf16.mxu0 0
        %1032 = vmatpush2.bf16.msra.mxu0 0
        %1033 = vmatprep.mubr.bf16.mxu0 0
        %1034 = vmatmul.mubr.bf16.gmra.mxu0 %v995
        %v1035 = vpop.f32.mrf.mxu0
        %v1036 = vadd.f32 0.0, %v1035
        %v1037 = vpop.f32.mrf.mxu0
        %v1038 = vpop.f32.mrf.mxu0
        %v1039 = vpop.f32.mrf.mxu0
        %1040 = vdwg.mxu0
        %v1042 = vsel %vm769, %v991, 0
        %v1045 = vsel %vm997, %v762, 0
        %1047 = vmatprep.subr.bf16.mxu0 0
        %1048 = vmatpush1.bf16.msra.mxu0 0
        %1049 = vmatprep.subr.bf16.mxu0 0
        %1050 = vmatpush1.bf16.msra.mxu0 0
        %1051 = vmatprep.subr.bf16.mxu0 0
        %1052 = vmatpush1.bf16.msra.mxu0 0
        %1053 = vmatprep.subr.bf16.mxu0 0
        %1054 = vmatpush1.bf16.msra.mxu0 0
        %1055 = vmatprep.subr.bf16.mxu0 0
        %1056 = vmatpush1.bf16.msra.mxu0 0
        %1057 = vmatprep.subr.bf16.mxu0 0
        %1058 = vmatpush1.bf16.msra.mxu0 0
        %1059 = vmatprep.subr.bf16.mxu0 0
        %1060 = vmatpush1.bf16.msra.mxu0 0
        %1061 = vmatprep.subr.bf16.mxu0 0
        %1062 = vmatpush1.bf16.msra.mxu0 %v1045
        %1063 = vmatprep.subr.bf16.mxu0 0
        %1064 = vmatpush2.bf16.msra.mxu0 0
        %1065 = vmatprep.subr.bf16.mxu0 0
        %1066 = vmatpush2.bf16.msra.mxu0 0
        %1067 = vmatprep.subr.bf16.mxu0 0
        %1068 = vmatpush2.bf16.msra.mxu0 0
        %1069 = vmatprep.subr.bf16.mxu0 0
        %1070 = vmatpush2.bf16.msra.mxu0 0
        %1071 = vmatprep.subr.bf16.mxu0 0
        %1072 = vmatpush2.bf16.msra.mxu0 0
        %1073 = vmatprep.subr.bf16.mxu0 0
        %1074 = vmatpush2.bf16.msra.mxu0 0
        %1075 = vmatprep.subr.bf16.mxu0 0
        %1076 = vmatpush2.bf16.msra.mxu0 0
        %1077 = vmatprep.subr.bf16.mxu0 0
        %1078 = vmatpush2.bf16.msra.mxu0 0
        %1079 = vmatprep.mubr.bf16.mxu0 0
        %1080 = vmatmul.mubr.bf16.gmra.mxu0 %v1042
        %v1081 = vpop.f32.mrf.mxu0
        %v1082 = vadd.f32 0.0, %v1081
        %v1083 = vpop.f32.mrf.mxu0
        %v1084 = vpop.f32.mrf.mxu0
        %v1085 = vpop.f32.mrf.mxu0
        %1086 = vdwg.mxu0
        %v1088 = vsel %vm769, %v992, 0
        %v1091 = vsel %vm997, %v765, 0
        %1093 = vmatprep.subr.bf16.mxu0 0
        %1094 = vmatpush1.bf16.msra.mxu0 0
        %1095 = vmatprep.subr.bf16.mxu0 0
        %1096 = vmatpush1.bf16.msra.mxu0 0
        %1097 = vmatprep.subr.bf16.mxu0 0
        %1098 = vmatpush1.bf16.msra.mxu0 0
        %1099 = vmatprep.subr.bf16.mxu0 0
        %1100 = vmatpush1.bf16.msra.mxu0 0
        %1101 = vmatprep.subr.bf16.mxu0 0
        %1102 = vmatpush1.bf16.msra.mxu0 0
        %1103 = vmatprep.subr.bf16.mxu0 0
        %1104 = vmatpush1.bf16.msra.mxu0 0
        %1105 = vmatprep.subr.bf16.mxu0 0
        %1106 = vmatpush1.bf16.msra.mxu0 0
        %1107 = vmatprep.subr.bf16.mxu0 0
        %1108 = vmatpush1.bf16.msra.mxu0 %v1091
        %1109 = vmatprep.subr.bf16.mxu0 0
        %1110 = vmatpush2.bf16.msra.mxu0 0
        %1111 = vmatprep.subr.bf16.mxu0 0
        %1112 = vmatpush2.bf16.msra.mxu0 0
        %1113 = vmatprep.subr.bf16.mxu0 0
        %1114 = vmatpush2.bf16.msra.mxu0 0
        %1115 = vmatprep.subr.bf16.mxu0 0
        %1116 = vmatpush2.bf16.msra.mxu0 0
        %1117 = vmatprep.subr.bf16.mxu0 0
        %1118 = vmatpush2.bf16.msra.mxu0 0
        %1119 = vmatprep.subr.bf16.mxu0 0
        %1120 = vmatpush2.bf16.msra.mxu0 0
        %1121 = vmatprep.subr.bf16.mxu0 0
        %1122 = vmatpush2.bf16.msra.mxu0 0
        %1123 = vmatprep.subr.bf16.mxu0 0
        %1124 = vmatpush2.bf16.msra.mxu0 0
        %1125 = vmatprep.mubr.bf16.mxu0 0
        %1126 = vmatmul.mubr.bf16.gmra.mxu0 %v1088
        %v1127 = vpop.f32.mrf.mxu0
        %v1128 = vadd.f32 0.0, %v1127
        %v1129 = vpop.f32.mrf.mxu0
        %v1130 = vpop.f32.mrf.mxu0
        %v1131 = vpop.f32.mrf.mxu0
        %1132 = vdwg.mxu0
        %v1134 = vsel %vm769, %v993, 0
        %v1137 = vsel %vm997, %v768, 0
        %1139 = vmatprep.subr.bf16.mxu0 0
        %1140 = vmatpush1.bf16.msra.mxu0 0
        %1141 = vmatprep.subr.bf16.mxu0 0
        %1142 = vmatpush1.bf16.msra.mxu0 0
        %1143 = vmatprep.subr.bf16.mxu0 0
        %1144 = vmatpush1.bf16.msra.mxu0 0
        %1145 = vmatprep.subr.bf16.mxu0 0
        %1146 = vmatpush1.bf16.msra.mxu0 0
        %1147 = vmatprep.subr.bf16.mxu0 0
        %1148 = vmatpush1.bf16.msra.mxu0 0
        %1149 = vmatprep.subr.bf16.mxu0 0
        %1150 = vmatpush1.bf16.msra.mxu0 0
        %1151 = vmatprep.subr.bf16.mxu0 0
        %1152 = vmatpush1.bf16.msra.mxu0 0
        %1153 = vmatprep.subr.bf16.mxu0 0
        %1154 = vmatpush1.bf16.msra.mxu0 %v1137
        %1155 = vmatprep.subr.bf16.mxu0 0
        %1156 = vmatpush2.bf16.msra.mxu0 0
        %1157 = vmatprep.subr.bf16.mxu0 0
        %1158 = vmatpush2.bf16.msra.mxu0 0
        %1159 = vmatprep.subr.bf16.mxu0 0
        %1160 = vmatpush2.bf16.msra.mxu0 0
        %1161 = vmatprep.subr.bf16.mxu0 0
        %1162 = vmatpush2.bf16.msra.mxu0 0
        %1163 = vmatprep.subr.bf16.mxu0 0
        %1164 = vmatpush2.bf16.msra.mxu0 0
        %1165 = vmatprep.subr.bf16.mxu0 0
        %1166 = vmatpush2.bf16.msra.mxu0 0
        %1167 = vmatprep.subr.bf16.mxu0 0
        %1168 = vmatpush2.bf16.msra.mxu0 0
        %1169 = vmatprep.subr.bf16.mxu0 0
        %1170 = vmatpush2.bf16.msra.mxu0 0
        %1171 = vmatprep.mubr.bf16.mxu0 0
        %1172 = vmatmul.mubr.bf16.gmra.mxu0 %v1134
        %v1173 = vpop.f32.mrf.mxu0
        %v1174 = vadd.f32 0.0, %v1173
        %v1175 = vpop.f32.mrf.mxu0
        %v1176 = vpop.f32.mrf.mxu0
        %v1177 = vpop.f32.mrf.mxu0
        %1178 = vdwg.mxu0
        %v1179 = vrcp.pop %v980
        %v1180 = vrcp.pop %v983
        %v1181 = vrcp.pop %v986
        %v1182 = vrcp.pop %v989
        %v1183 = vmul.f32 %v1036, %v1179
        %v1184 = vmul.f32 %v1082, %v1180
        %v1185 = vmul.f32 %v1128, %v1181
        %v1186 = vmul.f32 %v1174, %v1182
        %v1187 = vcombine.low %v1183, %v1185
        %v1188 = vcombine.high %v1183, %v1185
        %v1190 = vunpack.c.l.s4 1983009808
        %v1191 = vunpack.c.0.s8 %v1190
        %v1192 = vlaneseq
        %v1193 = vshrl.u32 %v1192, 7
        %v1194 = vsub.s32 %v1191, %v1193
        %v1195 = vrot.slane %v1187, %v1194
        %v1197 = vunpack.c.l.s4 1983009808
        %v1198 = vunpack.c.0.s8 %v1197
        %v1199 = vlaneseq
        %v1200 = vshrl.u32 %v1199, 7
        %v1201 = vsub.s32 %v1198, %v1200
        %v1202 = vrot.slane %v1188, %v1201
        %v1203 = vcombine.low %v1184, %v1186
        %v1204 = vcombine.high %v1184, %v1186
        %v1206 = vunpack.c.l.s4 1983009808
        %v1207 = vunpack.c.0.s8 %v1206
        %v1208 = vlaneseq
        %v1209 = vshrl.u32 %v1208, 7
        %v1210 = vsub.s32 %v1207, %v1209
        %v1211 = vrot.slane %v1203, %v1210
        %v1213 = vunpack.c.l.s4 1983009808
        %v1214 = vunpack.c.0.s8 %v1213
        %v1215 = vlaneseq
        %v1216 = vshrl.u32 %v1215, 7
        %v1217 = vsub.s32 %v1214, %v1216
        %v1218 = vrot.slane %v1204, %v1217
        %v1219 = vcombine.low %v1195, %v1211
        %v1220 = vcombine.high %v1195, %v1211
        %v1222 = vunpack.c.l.s4 1934713408
        %v1223 = vunpack.c.0.s8 %v1222
        %v1224 = vlaneseq
        %v1225 = vshrl.u32 %v1224, 7
        %v1226 = vsub.s32 %v1223, %v1225
        %v1227 = vrot.slane %v1219, %v1226
        %v1229 = vunpack.c.l.s4 1934713408
        %v1230 = vunpack.c.0.s8 %v1229
        %v1231 = vlaneseq
        %v1232 = vshrl.u32 %v1231, 7
        %v1233 = vsub.s32 %v1230, %v1232
        %v1234 = vrot.slane %v1220, %v1233
        %v1235 = vcombine.low %v1202, %v1218
        %v1236 = vcombine.high %v1202, %v1218
        %v1238 = vunpack.c.l.s4 1934713408
        %v1239 = vunpack.c.0.s8 %v1238
        %v1240 = vlaneseq
        %v1241 = vshrl.u32 %v1240, 7
        %v1242 = vsub.s32 %v1239, %v1241
        %v1243 = vrot.slane %v1235, %v1242
        %v1245 = vunpack.c.l.s4 1934713408
        %v1246 = vunpack.c.0.s8 %v1245
        %v1247 = vlaneseq
        %v1248 = vshrl.u32 %v1247, 7
        %v1249 = vsub.s32 %v1246, %v1248
        %v1250 = vrot.slane %v1236, %v1249
        %v1251 = vcombine.high %v1227, 0.0
        %v1252 = vcombine.high %v1234, 0.0
        %v1253 = vcombine.high %v1243, 0.0
        %v1254 = vcombine.high %v1250, 0.0
        %v1255 = vcombine.low %v1227, %v1234
        %v1257 = vunpack.c.l.s4 1983009808
        %v1258 = vunpack.c.0.s8 %v1257
        %v1259 = vlaneseq
        %v1260 = vshrl.u32 %v1259, 7
        %v1261 = vsub.s32 %v1258, %v1260
        %v1262 = vrot.slane %v1255, %v1261
        %v1263 = vcombine.low %v1251, %v1252
        %v1265 = vunpack.c.l.s4 1983009808
        %v1266 = vunpack.c.0.s8 %v1265
        %v1267 = vlaneseq
        %v1268 = vshrl.u32 %v1267, 7
        %v1269 = vsub.s32 %v1266, %v1268
        %v1270 = vrot.slane %v1263, %v1269
        %v1271 = vcombine.low %v1243, %v1250
        %v1273 = vunpack.c.l.s4 1983009808
        %v1274 = vunpack.c.0.s8 %v1273
        %v1275 = vlaneseq
        %v1276 = vshrl.u32 %v1275, 7
        %v1277 = vsub.s32 %v1274, %v1276
        %v1278 = vrot.slane %v1271, %v1277
        %v1279 = vcombine.low %v1253, %v1254
        %v1281 = vunpack.c.l.s4 1983009808
        %v1282 = vunpack.c.0.s8 %v1281
        %v1283 = vlaneseq
        %v1284 = vshrl.u32 %v1283, 7
        %v1285 = vsub.s32 %v1282, %v1284
        %v1286 = vrot.slane %v1279, %v1285
        %v1287 = vcombine.low %v1262, %v1270
        %v1288 = vcombine.high %v1262, %v1270
        %v1290 = vunpack.c.l.s4 1934713408
        %v1291 = vunpack.c.0.s8 %v1290
        %v1292 = vlaneseq
        %v1293 = vshrl.u32 %v1292, 7
        %v1294 = vsub.s32 %v1291, %v1293
        %v1295 = vrot.slane %v1287, %v1294
        %v1297 = vunpack.c.l.s4 1934713408
        %v1298 = vunpack.c.0.s8 %v1297
        %v1299 = vlaneseq
        %v1300 = vshrl.u32 %v1299, 7
        %v1301 = vsub.s32 %v1298, %v1300
        %v1302 = vrot.slane %v1288, %v1301
        %v1303 = vcombine.low %v1278, %v1286
        %v1304 = vcombine.high %v1278, %v1286
        %v1306 = vunpack.c.l.s4 1934713408
        %v1307 = vunpack.c.0.s8 %v1306
        %v1308 = vlaneseq
        %v1309 = vshrl.u32 %v1308, 7
        %v1310 = vsub.s32 %v1307, %v1309
        %v1311 = vrot.slane %v1303, %v1310
        %v1313 = vunpack.c.l.s4 1934713408
        %v1314 = vunpack.c.0.s8 %v1313
        %v1315 = vlaneseq
        %v1316 = vshrl.u32 %v1315, 7
        %v1317 = vsub.s32 %v1314, %v1316
        %v1318 = vrot.slane %v1304, %v1317
        %v1319 = vcombine.low %v1295, %v1311
        %v1320 = vcombine.high %v1295, %v1311
        %v1321 = vcombine.low %v1302, %v1318
        %v1322 = vcombine.high %v1302, %v1318
        %1324 = vrot.lane.b32.xlu0 %v1320, 8
        %v1325 = vpop.permute.xlu0 %1324
        %1328 = vrot.lane.b32.xlu0 %v1321, 16
        %v1329 = vpop.permute.xlu0 %1328
        %1332 = vrot.lane.b32.xlu0 %v1322, 24
        %v1333 = vpop.permute.xlu0 %1332
        %v1335 = vsel %vm769, %v1319, %v1325
        %vm1336 = vcmask 130048
        %v1337 = vsel %vm1336, %v1335, %v1329
        %vm1338 = vcmask 195584
        %v1339 = vsel %vm1338, %v1337, %v1333
        %vm1340 = vcmask 261120
        %1341 = vst.msk [vmem:[%s256] sm:$0xff] %vm1340, %v1339
        %s1342 = sand.u32 %s109, 1
        %s1343 = scalar_lea.sflag [#allocation4], %s1342
        %s1344 = sand.u32 %s109, 1
        %s1345 = smul.addr %s1344, 8
        %s1346 = scalar_lea.vmem [#allocation8], %s1345
        // Predicated region
        $region45: #{tpu_custom_call.1} parent=31 // pred_check
          %p1347 = pneg %p119
        $region46: #{tpu_custom_call.1} parent=31 // pred_check_branch
          %1349 = sbr.rel (%p1347) target = $region48
        $region47: #{tpu_custom_call.1} parent=31 // pred_region
          %s1351 = ssub.s32 128, 128
          %1352 = vsyncadd %s1343, %s1351
          %s1353 = smul.addr %s23, 128
          %s1354 = scalar_lea.hbm %s3, %s1353
          %s1356 = sshll.u32 %s1346, 4
          %s1357 = int_to_ptr.vmem [resolvable:$true] %s1356
          %1359 = dma.vmem_to_hbm [thread:$0]  %s1357, 128, %s1354, %s1343
        $region48: #{tpu_custom_call.1} parent=31 // pred_fallthru
          _
      $region32: #{tpu_custom_call.1} parent=5 // pred_fallthru
        _
      %p1360 = scmp.le.s32.totalorder 2, %s18
      // Predicated region
      $region49: #{tpu_custom_call.1} parent=5 // pred_check
        %p1361 = pneg %p1360
      $region50: #{tpu_custom_call.1} parent=5 // pred_check_branch
        %1363 = sbr.rel (%p1361) target = $region52
      $region51: #{tpu_custom_call.1} parent=5 // pred_region
        %s1364 = ssub.s32 %s18, 2
        // Predicated region
        $region53: #{tpu_custom_call.1} parent=51 // pred_check
          %p1365 = pneg %p125
        $region54: #{tpu_custom_call.1} parent=51 // pred_check_branch
          %1367 = sbr.rel (%p1365) target = $region56
        $region55: #{tpu_custom_call.1} parent=51 // pred_region
          %s1368 = sand.u32 %s110, 1
          %s1369 = scalar_lea.sflag [#allocation4], %s1368
          %s1370 = sand.u32 %s110, 1
          %s1371 = smul.addr %s1370, 8
          %s1372 = scalar_lea.vmem [#allocation8], %s1371
          %1373 = dma.done %s1369, 128
        $region56: #{tpu_custom_call.1} parent=51 // pred_fallthru
          _
      $region52: #{tpu_custom_call.1} parent=5 // pred_fallthru
        _
    $region6: #{tpu_custom_call.1} parent=1 // loop_footer
      %s22 = sadd.s32 1, %s18
    $region7: #{tpu_custom_call.1} parent=1 // loop_footer_branch
      %17 = sbr.rel target = $region3
    $region8: #{tpu_custom_call.1} parent=1 // loop_exit
      _
    %1374 = vsyncpa [#allocation3], 1
    %s1375 = scalar_lea.sflag [#allocation3], 1
    %1376 = vsyncpa %s1375, 1
    %1377 = vsyncpa [#allocation6], 1
    %s1378 = scalar_lea.sflag [#allocation6], 1
    %1379 = vsyncpa %s1378, 1
    %1380 = vsyncpa [#allocation4], 1
    %s1381 = scalar_lea.sflag [#allocation4], 1
    %1382 = vsyncpa %s1381, 1

</llo_original>
